<compile_context>
chip_gen: v6e
topology: v6e:2x2x1
jax: 0.10.0
libtpu: 0.0.40
codegen_flags: <defaults>
</compile_context>

<pallas_src>
import jax
import jax.numpy as jnp
from jax.experimental import pallas as pl
from jax.experimental.pallas import tpu as pltpu


# ------------------------- fused encoder+decoder kernel ------------------------- #
def fused_rnn_nar_kernel(x_ref, ft_ref, sel_ref, w_ih_ref, w_hh_ref, b_h_ref,
                         w_out_h_ref, w_out_fb_ref, y_ref):
    # x_ref:        (T_in*Bp, D_in)   time-major, batch padded to Bp=8 (VMEM)
    # ft_ref:       (F+1, B*T_out)    lane-major target features, last row = 1 (bias)
    # sel_ref:      (Bp, B*T_out)     0/1 selector: row b is 1 on columns b*T_out..+T_out
    # w_ih_ref:     (D_in, H), w_hh_ref: (H, H), b_h_ref: (1, H)
    # w_out_h_ref:  (1, H)
    # w_out_fb_ref: (1, F+1)          [w_out_f | b_out]
    # y_ref:        (1, B*T_out)      lane-dense output
    Bp = sel_ref.shape[0]                       # 8 = one full sublane group
    T_in = x_ref.shape[0] // Bp
    H = w_hh_ref.shape[0]

    # Feature head: independent of the recurrence -> hidden in MXU slack.
    # One MXU matmul, lane-dense result; b_out rides on the constant-1 row.
    fc = jnp.dot(w_out_fb_ref[...], ft_ref[...],
                 preferred_element_type=jnp.float32)                     # (1, B*T_out)

    # Input projection hoisted off the serial critical path: one batched MXU call.
    pre = jnp.dot(x_ref[...], w_ih_ref[...],
                  preferred_element_type=jnp.float32) + b_h_ref[...]     # (T_in*Bp, H)

    # Recurrence: only h @ W_hh + tanh remains on the serial dependency chain.
    # T_in is small and static -> fully unrolled; each pre slice is vreg-aligned
    # (multiple-of-8 sublane offset) because the batch is padded to Bp=8.
    w_hh = w_hh_ref[...]
    h = jnp.zeros((Bp, H), jnp.float32)
    for t in range(T_in):
        h = jnp.tanh(pre[t * Bp:(t + 1) * Bp, :]
                     + jnp.dot(h, w_hh, preferred_element_type=jnp.float32))

    # Hidden-state head: per-batch scalar hc, then broadcast across each batch's
    # T_out output columns via the 0/1 selector (padded batch rows are zeroed by
    # the selector, so their garbage h never reaches the output).
    hc_col = jnp.sum(h * w_out_h_ref[...], axis=-1, keepdims=True)       # (Bp, 1)
    hsel = jnp.sum(hc_col * sel_ref[...], axis=0, keepdims=True)         # (1, B*T_out)

    y_ref[...] = fc + hsel


def rnn_nar_forward(params, feats_in, inputs, feats_tgt):
    # feats_in: (B, T_in, F), inputs: (B, T_in, 1), feats_tgt: (B, T_out, F)
    B, T_in, F = feats_in.shape
    _, T_out, _ = feats_tgt.shape
    D_in = F + 1
    Bp = ((B + 7) // 8) * 8                     # pad batch to full sublane groups

    # Time-major, batch-padded 2D slab: per-step recurrence slices are whole,
    # 8-aligned sublane groups and the hoisted projection is one clean 2D matmul.
    x = jnp.concatenate([feats_in, inputs], axis=-1)                      # (B, T_in, D_in)
    x = jnp.pad(x, ((0, Bp - B), (0, 0), (0, 0)))                         # (Bp, T_in, D_in)
    x_tm = jnp.transpose(x, (1, 0, 2)).reshape(T_in * Bp, D_in)

    # Lane-major feature slab with a constant-1 row (folds b_out into the head).
    ft_fm = jnp.transpose(feats_tgt, (2, 0, 1)).reshape(F, B * T_out)     # (F, B*T_out)
    ft_aug = jnp.concatenate(
        [ft_fm, jnp.ones((1, B * T_out), jnp.float32)], axis=0)           # (F+1, B*T_out)

    # 0/1 selector spreading each batch's hidden contribution over its T_out columns.
    sel = jnp.kron(jnp.eye(B, dtype=jnp.float32),
                   jnp.ones((1, T_out), jnp.float32))                     # (B, B*T_out)
    sel = jnp.pad(sel, ((0, Bp - B), (0, 0)))                             # (Bp, B*T_out)

    w_out_fb = jnp.concatenate(
        [params["w_out_f"], params["b_out"][None, :]], axis=1)            # (1, F+1)

    vmem = pl.BlockSpec(memory_space=pltpu.MemorySpace.VMEM)

    y2d = pl.pallas_call(
        fused_rnn_nar_kernel,
        out_shape=jax.ShapeDtypeStruct((1, B * T_out), jnp.float32),
        in_specs=[vmem] * 8,
        out_specs=vmem,
    )(x_tm, ft_aug, sel,
      params["w_ih"], params["w_hh"], params["b_h"],
      params["w_out_h"], w_out_fb)

    return y2d.reshape(B, T_out)[:, :, None]                              # (B, T_out, 1)


# ------------------------------- pure-JAX reference ----------------------------- #
def reference_forward(params, feats_in, inputs, feats_tgt):
    x = jnp.concatenate([feats_in, inputs], axis=-1)
    B, T_in, _ = x.shape
    H = params["w_hh"].shape[0]
    h = jnp.zeros((B, H), jnp.float32)
    for t in range(T_in):
        h = jnp.tanh(x[:, t, :] @ params["w_ih"] + h @ params["w_hh"] + params["b_h"])
    hc = jnp.sum(h * params["w_out_h"], axis=-1, keepdims=True)           # (B, 1)
    fc = jnp.sum(feats_tgt * params["w_out_f"][None, :, :], axis=-1)      # (B, T_out)
    return (fc + hc + params["b_out"][0])[:, :, None]


# ---------------------------------- module glue ---------------------------------- #
class RNN_MSE_NAR_Pallas:
    """Mirrors RNN_MSE_NAR.forward: dispatches to base_models_dict[1]."""

    def __init__(self, base_models_dict):
        self.base_models_dict = base_models_dict

    def forward(self, feats_in_dict, inputs_dict, feats_tgt_dict,
                norm_dict=None, targets_dict=None):
        return self.base_models_dict[1](
            feats_in_dict[1], inputs_dict[1], feats_tgt_dict[1])


# ------------------------------------- main -------------------------------------- #
if __name__ == "__main__":
    B, T_IN, T_OUT, F, H = 2, 8, 8, 7, 32
    D_IN = F + 1

    key = jax.random.PRNGKey(0)
    k = jax.random.split(key, 9)

    params = {
        "w_ih":    0.1 * jax.random.normal(k[0], (D_IN, H), jnp.float32),
        "w_hh":    0.1 * jax.random.normal(k[1], (H, H), jnp.float32),
        "b_h":     0.1 * jax.random.normal(k[2], (1, H), jnp.float32),
        "w_out_h": 0.1 * jax.random.normal(k[3], (1, H), jnp.float32),
        "w_out_f": 0.1 * jax.random.normal(k[4], (1, F), jnp.float32),
        "b_out":   0.1 * jax.random.normal(k[5], (1,), jnp.float32),
    }

    feats_in = jax.random.normal(k[6], (B, T_IN, F), jnp.float32)
    inputs = jax.random.normal(k[7], (B, T_IN, 1), jnp.float32)
    feats_tgt = jax.random.normal(k[8], (B, T_OUT, F), jnp.float32)

    # TODO(synk): the real base_models_dict[1] architecture is defined outside this
    # module; a representative NAR RNN forecaster is used here.
    base_model = jax.jit(lambda fi, xi, ft: rnn_nar_forward(params, fi, xi, ft))
    model = RNN_MSE_NAR_Pallas({1: base_model})

    y = model.forward({1: feats_in}, {1: inputs}, {1: feats_tgt}, norm_dict=None)
    y = jax.block_until_ready(y)

    assert y.shape == (B, T_OUT, 1) and y.dtype == jnp.float32
    y_ref = reference_forward(params, feats_in, inputs, feats_tgt)
    max_err = float(jnp.max(jnp.abs(y - y_ref)))
    assert jnp.allclose(y, y_ref, atol=2e-5, rtol=2e-5), max_err
    print("KERNEL_OK")
</pallas_src>

<mosaic_0001>
module attributes {stable_mosaic.version = 11 : i64} {
  func.func @fused_rnn_nar_kernel(%arg0: memref<64x8xf32, #tpu.memory_space<vmem>>, %arg1: memref<8x16xf32, #tpu.memory_space<vmem>>, %arg2: memref<8x16xf32, #tpu.memory_space<vmem>>, %arg3: memref<8x32xf32, #tpu.memory_space<vmem>>, %arg4: memref<32x32xf32, #tpu.memory_space<vmem>>, %arg5: memref<1x32xf32, #tpu.memory_space<vmem>>, %arg6: memref<1x32xf32, #tpu.memory_space<vmem>>, %arg7: memref<1x8xf32, #tpu.memory_space<vmem>>, %arg8: memref<1x16xf32, #tpu.memory_space<vmem>>) attributes {dimension_semantics = [], scalar_prefetch = 0 : i64, scratch_operands = 0 : i64, tpu.core_type = #tpu.core_type<tc>} {
    %c0 = arith.constant 0 : index
    %c0_0 = arith.constant 0 : index
    %0 = vector.load %arg7[%c0, %c0_0] : memref<1x8xf32, #tpu.memory_space<vmem>>, vector<1x8xf32>
    %c0_1 = arith.constant 0 : index
    %c0_2 = arith.constant 0 : index
    %1 = vector.load %arg1[%c0_1, %c0_2] : memref<8x16xf32, #tpu.memory_space<vmem>>, vector<8x16xf32>
    %cst = arith.constant dense<0.000000e+00> : vector<1x16xf32>
    %2 = tpu.matmul %0, %1, %cst {dimension_numbers = #tpu.dot_dimension_numbers<[1], [0], [0], [1], [0, 0, 1, 1], [], []>} : vector<1x8xf32>, vector<8x16xf32>, vector<1x16xf32> -> vector<1x16xf32>
    %c0_3 = arith.constant 0 : index
    %c0_4 = arith.constant 0 : index
    %3 = vector.load %arg0[%c0_3, %c0_4] : memref<64x8xf32, #tpu.memory_space<vmem>>, vector<64x8xf32>
    %c0_5 = arith.constant 0 : index
    %c0_6 = arith.constant 0 : index
    %4 = vector.load %arg3[%c0_5, %c0_6] : memref<8x32xf32, #tpu.memory_space<vmem>>, vector<8x32xf32>
    %cst_7 = arith.constant dense<0.000000e+00> : vector<64x32xf32>
    %5 = tpu.matmul %3, %4, %cst_7 {dimension_numbers = #tpu.dot_dimension_numbers<[1], [0], [0], [1], [0, 0, 1, 1], [], []>} : vector<64x8xf32>, vector<8x32xf32>, vector<64x32xf32> -> vector<64x32xf32>
    %c0_8 = arith.constant 0 : index
    %c0_9 = arith.constant 0 : index
    %6 = vector.load %arg5[%c0_8, %c0_9] : memref<1x32xf32, #tpu.memory_space<vmem>>, vector<1x32xf32>
    %7 = vector.broadcast %6 : vector<1x32xf32> to vector<64x32xf32>
    %8 = arith.addf %5, %7 : vector<64x32xf32>
    %c0_10 = arith.constant 0 : index
    %c0_11 = arith.constant 0 : index
    %9 = vector.load %arg4[%c0_10, %c0_11] : memref<32x32xf32, #tpu.memory_space<vmem>>, vector<32x32xf32>
    %cst_12 = arith.constant 0.000000e+00 : f32
    %10 = vector.broadcast %cst_12 : f32 to vector<8x32xf32>
    %11 = vector.extract_strided_slice %8 {offsets = [0, 0], sizes = [8, 32], strides = [1, 1]} : vector<64x32xf32> to vector<8x32xf32>
    %cst_13 = arith.constant dense<0.000000e+00> : vector<8x32xf32>
    %12 = tpu.matmul %10, %9, %cst_13 {dimension_numbers = #tpu.dot_dimension_numbers<[1], [0], [0], [1], [0, 0, 1, 1], [], []>} : vector<8x32xf32>, vector<32x32xf32>, vector<8x32xf32> -> vector<8x32xf32>
    %13 = arith.addf %11, %12 : vector<8x32xf32>
    %14 = math.tanh %13 : vector<8x32xf32>
    %15 = vector.extract_strided_slice %8 {offsets = [8, 0], sizes = [8, 32], strides = [1, 1]} : vector<64x32xf32> to vector<8x32xf32>
    %cst_14 = arith.constant dense<0.000000e+00> : vector<8x32xf32>
    %16 = tpu.matmul %14, %9, %cst_14 {dimension_numbers = #tpu.dot_dimension_numbers<[1], [0], [0], [1], [0, 0, 1, 1], [], []>} : vector<8x32xf32>, vector<32x32xf32>, vector<8x32xf32> -> vector<8x32xf32>
    %17 = arith.addf %15, %16 : vector<8x32xf32>
    %18 = math.tanh %17 : vector<8x32xf32>
    %19 = vector.extract_strided_slice %8 {offsets = [16, 0], sizes = [8, 32], strides = [1, 1]} : vector<64x32xf32> to vector<8x32xf32>
    %cst_15 = arith.constant dense<0.000000e+00> : vector<8x32xf32>
    %20 = tpu.matmul %18, %9, %cst_15 {dimension_numbers = #tpu.dot_dimension_numbers<[1], [0], [0], [1], [0, 0, 1, 1], [], []>} : vector<8x32xf32>, vector<32x32xf32>, vector<8x32xf32> -> vector<8x32xf32>
    %21 = arith.addf %19, %20 : vector<8x32xf32>
    %22 = math.tanh %21 : vector<8x32xf32>
    %23 = vector.extract_strided_slice %8 {offsets = [24, 0], sizes = [8, 32], strides = [1, 1]} : vector<64x32xf32> to vector<8x32xf32>
    %cst_16 = arith.constant dense<0.000000e+00> : vector<8x32xf32>
    %24 = tpu.matmul %22, %9, %cst_16 {dimension_numbers = #tpu.dot_dimension_numbers<[1], [0], [0], [1], [0, 0, 1, 1], [], []>} : vector<8x32xf32>, vector<32x32xf32>, vector<8x32xf32> -> vector<8x32xf32>
    %25 = arith.addf %23, %24 : vector<8x32xf32>
    %26 = math.tanh %25 : vector<8x32xf32>
    %27 = vector.extract_strided_slice %8 {offsets = [32, 0], sizes = [8, 32], strides = [1, 1]} : vector<64x32xf32> to vector<8x32xf32>
    %cst_17 = arith.constant dense<0.000000e+00> : vector<8x32xf32>
    %28 = tpu.matmul %26, %9, %cst_17 {dimension_numbers = #tpu.dot_dimension_numbers<[1], [0], [0], [1], [0, 0, 1, 1], [], []>} : vector<8x32xf32>, vector<32x32xf32>, vector<8x32xf32> -> vector<8x32xf32>
    %29 = arith.addf %27, %28 : vector<8x32xf32>
    %30 = math.tanh %29 : vector<8x32xf32>
    %31 = vector.extract_strided_slice %8 {offsets = [40, 0], sizes = [8, 32], strides = [1, 1]} : vector<64x32xf32> to vector<8x32xf32>
    %cst_18 = arith.constant dense<0.000000e+00> : vector<8x32xf32>
    %32 = tpu.matmul %30, %9, %cst_18 {dimension_numbers = #tpu.dot_dimension_numbers<[1], [0], [0], [1], [0, 0, 1, 1], [], []>} : vector<8x32xf32>, vector<32x32xf32>, vector<8x32xf32> -> vector<8x32xf32>
    %33 = arith.addf %31, %32 : vector<8x32xf32>
    %34 = math.tanh %33 : vector<8x32xf32>
    %35 = vector.extract_strided_slice %8 {offsets = [48, 0], sizes = [8, 32], strides = [1, 1]} : vector<64x32xf32> to vector<8x32xf32>
    %cst_19 = arith.constant dense<0.000000e+00> : vector<8x32xf32>
    %36 = tpu.matmul %34, %9, %cst_19 {dimension_numbers = #tpu.dot_dimension_numbers<[1], [0], [0], [1], [0, 0, 1, 1], [], []>} : vector<8x32xf32>, vector<32x32xf32>, vector<8x32xf32> -> vector<8x32xf32>
    %37 = arith.addf %35, %36 : vector<8x32xf32>
    %38 = math.tanh %37 : vector<8x32xf32>
    %39 = vector.extract_strided_slice %8 {offsets = [56, 0], sizes = [8, 32], strides = [1, 1]} : vector<64x32xf32> to vector<8x32xf32>
    %cst_20 = arith.constant dense<0.000000e+00> : vector<8x32xf32>
    %40 = tpu.matmul %38, %9, %cst_20 {dimension_numbers = #tpu.dot_dimension_numbers<[1], [0], [0], [1], [0, 0, 1, 1], [], []>} : vector<8x32xf32>, vector<32x32xf32>, vector<8x32xf32> -> vector<8x32xf32>
    %41 = arith.addf %39, %40 : vector<8x32xf32>
    %42 = math.tanh %41 : vector<8x32xf32>
    %c0_21 = arith.constant 0 : index
    %c0_22 = arith.constant 0 : index
    %43 = vector.load %arg6[%c0_21, %c0_22] : memref<1x32xf32, #tpu.memory_space<vmem>>, vector<1x32xf32>
    %44 = vector.broadcast %43 : vector<1x32xf32> to vector<8x32xf32>
    %45 = arith.mulf %42, %44 : vector<8x32xf32>
    %cst_23 = arith.constant dense<0.000000e+00> : vector<8xf32>
    %46 = vector.multi_reduction <add>, %45, %cst_23 [1] : vector<8x32xf32> to vector<8xf32>
    %47 = vector.shape_cast %46 : vector<8xf32> to vector<8x1xf32>
    %c0_24 = arith.constant 0 : index
    %c0_25 = arith.constant 0 : index
    %48 = vector.load %arg2[%c0_24, %c0_25] : memref<8x16xf32, #tpu.memory_space<vmem>>, vector<8x16xf32>
    %49 = vector.broadcast %47 : vector<8x1xf32> to vector<8x16xf32>
    %50 = arith.mulf %49, %48 : vector<8x16xf32>
    %cst_26 = arith.constant dense<0.000000e+00> : vector<16xf32>
    %51 = vector.multi_reduction <add>, %50, %cst_26 [0] : vector<8x16xf32> to vector<16xf32>
    %52 = vector.shape_cast %51 : vector<16xf32> to vector<1x16xf32>
    %53 = arith.addf %2, %52 : vector<1x16xf32>
    %c0_27 = arith.constant 0 : index
    %c0_28 = arith.constant 0 : index
    %54 = vector.load %arg8[%c0_27, %c0_28] : memref<1x16xf32, #tpu.memory_space<vmem>>, vector<1x16xf32>
    tpu.vector_store %arg8[%c0_27, %c0_28], %53 {strides = array<i32>} : memref<1x16xf32, #tpu.memory_space<vmem>>, vector<1x16xf32>,
    return
  }
}

</mosaic_0001>

<llo_original>
// kernel: _lambda_.1
$region0: #{_lambda_.1}
  #allocation0 [shape = 'u32[]', space=smem, size = 0x4, offset = 0x4, fixed_abs, tag = 'smem constant byte address 0x4 - core index']
  #allocation1 [shape = 'u32[144,128]{1,0:T(1,128)}', space=vmem, size = 0x12000, scoped, tag = 'internal scratch']
  %s0 = inlined_call_operand.vmem [shape: f32[64,8], index: 0, kind: input, shape index: {}]
  %s1 = inlined_call_operand.vmem [shape: f32[8,16], index: 1, kind: input, shape index: {}]
  %s2 = inlined_call_operand.vmem [shape: f32[8,16], index: 2, kind: input, shape index: {}]
  %s3 = inlined_call_operand.vmem [shape: f32[8,32], index: 3, kind: input, shape index: {}]
  %s4 = inlined_call_operand.vmem [shape: f32[32,32], index: 4, kind: input, shape index: {}]
  %s5 = inlined_call_operand.vmem [shape: f32[1,32], index: 5, kind: input, shape index: {}]
  %s6 = inlined_call_operand.vmem [shape: f32[1,32], index: 6, kind: input, shape index: {}]
  %s7 = inlined_call_operand.vmem [shape: f32[1,8], index: 7, kind: input, shape index: {}]
  %s8 = inlined_call_operand.vmem [shape: f32[1,16], index: 8, kind: output, shape index: {}]
  %s9 = sld [smem:[#allocation0]]
  $region42: #{_lambda_.1} parent=0
    _
  %s11 = ssub.s32 1, %s9
  %s12 = scalar_select 0, %s11, %s9
  // Predicated region
  $region2: #{_lambda_.1} parent=0 // pred_check
    _
  $region3: #{_lambda_.1} parent=0 // pred_check_branch
    %14 = sbr.rel (0) target = $region5
  $region4: #{_lambda_.1} parent=0 // pred_region
    _
  $region5: #{_lambda_.1} parent=0 // pred_fallthru
    _
  // Predicated region
  $region6: #{_lambda_.1} parent=0 // pred_check
    _
  $region7: #{_lambda_.1} parent=0 // pred_check_branch
    %16 = sbr.rel (0) target = $region9
  $region8: #{_lambda_.1} parent=0 // pred_region
    _
  $region9: #{_lambda_.1} parent=0 // pred_fallthru
    _
  // Predicated region
  $region10: #{_lambda_.1} parent=0 // pred_check
    _
  $region11: #{_lambda_.1} parent=0 // pred_check_branch
    %18 = sbr.rel (0) target = $region13
  $region12: #{_lambda_.1} parent=0 // pred_region
    _
  $region13: #{_lambda_.1} parent=0 // pred_fallthru
    _
  // Predicated region
  $region14: #{_lambda_.1} parent=0 // pred_check
    _
  $region15: #{_lambda_.1} parent=0 // pred_check_branch
    %20 = sbr.rel (0) target = $region17
  $region16: #{_lambda_.1} parent=0 // pred_region
    _
  $region17: #{_lambda_.1} parent=0 // pred_fallthru
    _
  // Predicated region
  $region18: #{_lambda_.1} parent=0 // pred_check
    _
  $region19: #{_lambda_.1} parent=0 // pred_check_branch
    %22 = sbr.rel (0) target = $region21
  $region20: #{_lambda_.1} parent=0 // pred_region
    _
  $region21: #{_lambda_.1} parent=0 // pred_fallthru
    _
  // Predicated region
  $region22: #{_lambda_.1} parent=0 // pred_check
    _
  $region23: #{_lambda_.1} parent=0 // pred_check_branch
    %24 = sbr.rel (0) target = $region25
  $region24: #{_lambda_.1} parent=0 // pred_region
    _
  $region25: #{_lambda_.1} parent=0 // pred_fallthru
    _
  // Predicated region
  $region26: #{_lambda_.1} parent=0 // pred_check
    _
  $region27: #{_lambda_.1} parent=0 // pred_check_branch
    %26 = sbr.rel (0) target = $region29
  $region28: #{_lambda_.1} parent=0 // pred_region
    _
  $region29: #{_lambda_.1} parent=0 // pred_fallthru
    _
  // Predicated region
  $region30: #{_lambda_.1} parent=0 // pred_check
    _
  $region31: #{_lambda_.1} parent=0 // pred_check_branch
    %28 = sbr.rel (0) target = $region33
  $region32: #{_lambda_.1} parent=0 // pred_region
    _
  $region33: #{_lambda_.1} parent=0 // pred_fallthru
    _
  %v29 = vld [vmem:[%s7] sm:$0x1]
  %v30 = vld [vmem:[%s1] sm:$0xff]
  %v31 = vld [vmem:[%s0] sm:$0xff]
  %v32 = vld [vmem:[%s0 + $0x8] sm:$0xff]
  %v33 = vld [vmem:[%s0 + $0x10] sm:$0xff]
  %v34 = vld [vmem:[%s0 + $0x18] sm:$0xff]
  %v35 = vld [vmem:[%s0 + $0x20] sm:$0xff]
  %v36 = vld [vmem:[%s0 + $0x28] sm:$0xff]
  %v37 = vld [vmem:[%s0 + $0x30] sm:$0xff]
  %v38 = vld [vmem:[%s0 + $0x38] sm:$0xff]
  %v39 = vld [vmem:[%s3] sm:$0xff]
  %v40 = vld [vmem:[%s5] sm:$0x1]
  %v42 = vlaneseq
  %v43 = vshrl.u32 %v42, 7
  %v44 = vsub.s32 0, %v43
  %v45 = vrot.slane %v40, %v44
  %vm47 = vcmask 64512
  %v49 = vsel %vm47, %v31, 0
  %v52 = vsel %vm47, %v32, 0
  %v55 = vsel %vm47, %v33, 0
  %v58 = vsel %vm47, %v34, 0
  %v61 = vsel %vm47, %v35, 0
  %v64 = vsel %vm47, %v36, 0
  %v67 = vsel %vm47, %v37, 0
  %v70 = vsel %vm47, %v38, 0
  %72 = vmatprep.subr.mxu0 0.0
  %73 = vmatpush1.msra.mxu0 0.0
  %74 = vmatprep.subr.mxu0 0.0
  %75 = vmatpush1.msra.mxu0 0.0
  %76 = vmatprep.subr.mxu0 0.0
  %77 = vmatpush1.msra.mxu0 0.0
  %78 = vmatprep.subr.mxu0 0.0
  %79 = vmatpush1.msra.mxu0 0.0
  %80 = vmatprep.subr.mxu0 0.0
  %81 = vmatpush1.msra.mxu0 0.0
  %82 = vmatprep.subr.mxu0 0.0
  %83 = vmatpush1.msra.mxu0 0.0
  %84 = vmatprep.subr.mxu0 0.0
  %85 = vmatpush1.msra.mxu0 0.0
  %86 = vmatprep.subr.mxu0 0.0
  %87 = vmatpush1.msra.mxu0 0.0
  %88 = vmatprep.subr.mxu0 0.0
  %89 = vmatpush1.msra.mxu0 0.0
  %90 = vmatprep.subr.mxu0 0.0
  %91 = vmatpush1.msra.mxu0 0.0
  %92 = vmatprep.subr.mxu0 0.0
  %93 = vmatpush1.msra.mxu0 0.0
  %94 = vmatprep.subr.mxu0 0.0
  %95 = vmatpush1.msra.mxu0 0.0
  %96 = vmatprep.subr.mxu0 0.0
  %97 = vmatpush1.msra.mxu0 0.0
  %98 = vmatprep.subr.mxu0 0.0
  %99 = vmatpush1.msra.mxu0 0.0
  %100 = vmatprep.subr.mxu0 0.0
  %101 = vmatpush1.msra.mxu0 0.0
  %102 = vmatprep.subr.mxu0 0.0
  %103 = vmatpush1.msra.mxu0 %v39
  %104 = vmatprep.subr.mxu0 0.0
  %105 = vmatpush2.msra.mxu0 0.0
  %106 = vmatprep.subr.mxu0 0.0
  %107 = vmatpush2.msra.mxu0 0.0
  %108 = vmatprep.subr.mxu0 0.0
  %109 = vmatpush2.msra.mxu0 0.0
  %110 = vmatprep.subr.mxu0 0.0
  %111 = vmatpush2.msra.mxu0 0.0
  %112 = vmatprep.subr.mxu0 0.0
  %113 = vmatpush2.msra.mxu0 0.0
  %114 = vmatprep.subr.mxu0 0.0
  %115 = vmatpush2.msra.mxu0 0.0
  %116 = vmatprep.subr.mxu0 0.0
  %117 = vmatpush2.msra.mxu0 0.0
  %118 = vmatprep.subr.mxu0 0.0
  %119 = vmatpush2.msra.mxu0 0.0
  %120 = vmatprep.subr.mxu0 0.0
  %121 = vmatpush2.msra.mxu0 0.0
  %122 = vmatprep.subr.mxu0 0.0
  %123 = vmatpush2.msra.mxu0 0.0
  %124 = vmatprep.subr.mxu0 0.0
  %125 = vmatpush2.msra.mxu0 0.0
  %126 = vmatprep.subr.mxu0 0.0
  %127 = vmatpush2.msra.mxu0 0.0
  %128 = vmatprep.subr.mxu0 0.0
  %129 = vmatpush2.msra.mxu0 0.0
  %130 = vmatprep.subr.mxu0 0.0
  %131 = vmatpush2.msra.mxu0 0.0
  %132 = vmatprep.subr.mxu0 0.0
  %133 = vmatpush2.msra.mxu0 0.0
  %134 = vmatprep.subr.mxu0 0.0
  %135 = vmatpush2.msra.mxu0 0.0
  %136 = vmatprep.mubr.f32.mxu0 0.0
  %137 = vmatmul.mubr.f32.gmra.mxu0 %v49
  %v138 = vpop.f32.mrf.mxu0
  %v139 = vadd.f32 %v45, %v138
  %v140 = vpop.f32.mrf.mxu0
  %141 = vmatprep.mubr.f32.mxu0 0.0
  %142 = vmatmul.mubr.f32.gmra.mxu0 %v52
  %v143 = vpop.f32.mrf.mxu0
  %v144 = vadd.f32 %v45, %v143
  %v145 = vpop.f32.mrf.mxu0
  %146 = vmatprep.mubr.f32.mxu0 0.0
  %147 = vmatmul.mubr.f32.gmra.mxu0 %v55
  %v148 = vpop.f32.mrf.mxu0
  %v149 = vadd.f32 %v45, %v148
  %v150 = vpop.f32.mrf.mxu0
  %151 = vmatprep.mubr.f32.mxu0 0.0
  %152 = vmatmul.mubr.f32.gmra.mxu0 %v58
  %v153 = vpop.f32.mrf.mxu0
  %v154 = vadd.f32 %v45, %v153
  %v155 = vpop.f32.mrf.mxu0
  %156 = vmatprep.mubr.f32.mxu0 0.0
  %157 = vmatmul.mubr.f32.gmra.mxu0 %v61
  %v158 = vpop.f32.mrf.mxu0
  %v159 = vadd.f32 %v45, %v158
  %v160 = vpop.f32.mrf.mxu0
  %161 = vmatprep.mubr.f32.mxu0 0.0
  %162 = vmatmul.mubr.f32.gmra.mxu0 %v64
  %v163 = vpop.f32.mrf.mxu0
  %v164 = vadd.f32 %v45, %v163
  %v165 = vpop.f32.mrf.mxu0
  %166 = vmatprep.mubr.f32.mxu0 0.0
  %167 = vmatmul.mubr.f32.gmra.mxu0 %v67
  %v168 = vpop.f32.mrf.mxu0
  %v169 = vadd.f32 %v45, %v168
  %v170 = vpop.f32.mrf.mxu0
  %171 = vmatprep.mubr.f32.mxu0 0.0
  %172 = vmatmul.mubr.f32.gmra.mxu0 %v70
  %v173 = vpop.f32.mrf.mxu0
  %v174 = vadd.f32 %v45, %v173
  %v175 = vpop.f32.mrf.mxu0
  %176 = vdwg.mxu0
  %v177 = vld [vmem:[%s4] sm:$0xff]
  %v178 = vld [vmem:[%s4 + $0x8] sm:$0xff]
  %v179 = vld [vmem:[%s4 + $0x10] sm:$0xff]
  %v180 = vld [vmem:[%s4 + $0x18] sm:$0xff]
  %vm181 = vcmask 261120
  %v183 = vsel %vm181, 0.0, 0
  %185 = vmatprep.subr.mxu0 0.0
  %186 = vmatpush1.msra.mxu0 0.0
  %187 = vmatprep.subr.mxu0 0.0
  %188 = vmatpush1.msra.mxu0 0.0
  %189 = vmatprep.subr.mxu0 0.0
  %190 = vmatpush1.msra.mxu0 0.0
  %191 = vmatprep.subr.mxu0 0.0
  %192 = vmatpush1.msra.mxu0 0.0
  %193 = vmatprep.subr.mxu0 0.0
  %194 = vmatpush1.msra.mxu0 0.0
  %195 = vmatprep.subr.mxu0 0.0
  %196 = vmatpush1.msra.mxu0 0.0
  %197 = vmatprep.subr.mxu0 0.0
  %198 = vmatpush1.msra.mxu0 0.0
  %199 = vmatprep.subr.mxu0 0.0
  %200 = vmatpush1.msra.mxu0 0.0
  %201 = vmatprep.subr.mxu0 0.0
  %202 = vmatpush1.msra.mxu0 0.0
  %203 = vmatprep.subr.mxu0 0.0
  %204 = vmatpush1.msra.mxu0 0.0
  %205 = vmatprep.subr.mxu0 0.0
  %206 = vmatpush1.msra.mxu0 0.0
  %207 = vmatprep.subr.mxu0 0.0
  %208 = vmatpush1.msra.mxu0 0.0
  %209 = vmatprep.subr.mxu0 0.0
  %210 = vmatpush1.msra.mxu0 %v180
  %211 = vmatprep.subr.mxu0 0.0
  %212 = vmatpush1.msra.mxu0 %v179
  %213 = vmatprep.subr.mxu0 0.0
  %214 = vmatpush1.msra.mxu0 %v178
  %215 = vmatprep.subr.mxu0 0.0
  %216 = vmatpush1.msra.mxu0 %v177
  %217 = vmatprep.subr.mxu0 0.0
  %218 = vmatpush2.msra.mxu0 0.0
  %219 = vmatprep.subr.mxu0 0.0
  %220 = vmatpush2.msra.mxu0 0.0
  %221 = vmatprep.subr.mxu0 0.0
  %222 = vmatpush2.msra.mxu0 0.0
  %223 = vmatprep.subr.mxu0 0.0
  %224 = vmatpush2.msra.mxu0 0.0
  %225 = vmatprep.subr.mxu0 0.0
  %226 = vmatpush2.msra.mxu0 0.0
  %227 = vmatprep.subr.mxu0 0.0
  %228 = vmatpush2.msra.mxu0 0.0
  %229 = vmatprep.subr.mxu0 0.0
  %230 = vmatpush2.msra.mxu0 0.0
  %231 = vmatprep.subr.mxu0 0.0
  %232 = vmatpush2.msra.mxu0 0.0
  %233 = vmatprep.subr.mxu0 0.0
  %234 = vmatpush2.msra.mxu0 0.0
  %235 = vmatprep.subr.mxu0 0.0
  %236 = vmatpush2.msra.mxu0 0.0
  %237 = vmatprep.subr.mxu0 0.0
  %238 = vmatpush2.msra.mxu0 0.0
  %239 = vmatprep.subr.mxu0 0.0
  %240 = vmatpush2.msra.mxu0 0.0
  %241 = vmatprep.subr.mxu0 0.0
  %242 = vmatpush2.msra.mxu0 0.0
  %243 = vmatprep.subr.mxu0 0.0
  %244 = vmatpush2.msra.mxu0 0.0
  %245 = vmatprep.subr.mxu0 0.0
  %246 = vmatpush2.msra.mxu0 0.0
  %247 = vmatprep.subr.mxu0 0.0
  %248 = vmatpush2.msra.mxu0 0.0
  %249 = vmatprep.mubr.f32.mxu0 0.0
  %250 = vmatmul.mubr.f32.gmra.mxu0 %v183
  %v251 = vpop.f32.mrf.mxu0
  %v252 = vadd.f32 0.0, %v251
  %v253 = vpop.f32.mrf.mxu0
  %254 = vdwg.mxu0
  %v255 = vadd.f32 %v139, %v252
  %v256 = vtanh.pop %v255
  %v258 = vsel %vm181, %v256, 0
  %260 = vmatprep.subr.mxu0 0.0
  %261 = vmatpush1.msra.mxu0 0.0
  %262 = vmatprep.subr.mxu0 0.0
  %263 = vmatpush1.msra.mxu0 0.0
  %264 = vmatprep.subr.mxu0 0.0
  %265 = vmatpush1.msra.mxu0 0.0
  %266 = vmatprep.subr.mxu0 0.0
  %267 = vmatpush1.msra.mxu0 0.0
  %268 = vmatprep.subr.mxu0 0.0
  %269 = vmatpush1.msra.mxu0 0.0
  %270 = vmatprep.subr.mxu0 0.0
  %271 = vmatpush1.msra.mxu0 0.0
  %272 = vmatprep.subr.mxu0 0.0
  %273 = vmatpush1.msra.mxu0 0.0
  %274 = vmatprep.subr.mxu0 0.0
  %275 = vmatpush1.msra.mxu0 0.0
  %276 = vmatprep.subr.mxu0 0.0
  %277 = vmatpush1.msra.mxu0 0.0
  %278 = vmatprep.subr.mxu0 0.0
  %279 = vmatpush1.msra.mxu0 0.0
  %280 = vmatprep.subr.mxu0 0.0
  %281 = vmatpush1.msra.mxu0 0.0
  %282 = vmatprep.subr.mxu0 0.0
  %283 = vmatpush1.msra.mxu0 0.0
  %284 = vmatprep.subr.mxu0 0.0
  %285 = vmatpush1.msra.mxu0 %v180
  %286 = vmatprep.subr.mxu0 0.0
  %287 = vmatpush1.msra.mxu0 %v179
  %288 = vmatprep.subr.mxu0 0.0
  %289 = vmatpush1.msra.mxu0 %v178
  %290 = vmatprep.subr.mxu0 0.0
  %291 = vmatpush1.msra.mxu0 %v177
  %292 = vmatprep.subr.mxu0 0.0
  %293 = vmatpush2.msra.mxu0 0.0
  %294 = vmatprep.subr.mxu0 0.0
  %295 = vmatpush2.msra.mxu0 0.0
  %296 = vmatprep.subr.mxu0 0.0
  %297 = vmatpush2.msra.mxu0 0.0
  %298 = vmatprep.subr.mxu0 0.0
  %299 = vmatpush2.msra.mxu0 0.0
  %300 = vmatprep.subr.mxu0 0.0
  %301 = vmatpush2.msra.mxu0 0.0
  %302 = vmatprep.subr.mxu0 0.0
  %303 = vmatpush2.msra.mxu0 0.0
  %304 = vmatprep.subr.mxu0 0.0
  %305 = vmatpush2.msra.mxu0 0.0
  %306 = vmatprep.subr.mxu0 0.0
  %307 = vmatpush2.msra.mxu0 0.0
  %308 = vmatprep.subr.mxu0 0.0
  %309 = vmatpush2.msra.mxu0 0.0
  %310 = vmatprep.subr.mxu0 0.0
  %311 = vmatpush2.msra.mxu0 0.0
  %312 = vmatprep.subr.mxu0 0.0
  %313 = vmatpush2.msra.mxu0 0.0
  %314 = vmatprep.subr.mxu0 0.0
  %315 = vmatpush2.msra.mxu0 0.0
  %316 = vmatprep.subr.mxu0 0.0
  %317 = vmatpush2.msra.mxu0 0.0
  %318 = vmatprep.subr.mxu0 0.0
  %319 = vmatpush2.msra.mxu0 0.0
  %320 = vmatprep.subr.mxu0 0.0
  %321 = vmatpush2.msra.mxu0 0.0
  %322 = vmatprep.subr.mxu0 0.0
  %323 = vmatpush2.msra.mxu0 0.0
  %324 = vmatprep.mubr.f32.mxu0 0.0
  %325 = vmatmul.mubr.f32.gmra.mxu0 %v258
  %v326 = vpop.f32.mrf.mxu0
  %v327 = vadd.f32 0.0, %v326
  %v328 = vpop.f32.mrf.mxu0
  %329 = vdwg.mxu0
  %v330 = vadd.f32 %v144, %v327
  %v331 = vtanh.pop %v330
  %v333 = vsel %vm181, %v331, 0
  %335 = vmatprep.subr.mxu0 0.0
  %336 = vmatpush1.msra.mxu0 0.0
  %337 = vmatprep.subr.mxu0 0.0
  %338 = vmatpush1.msra.mxu0 0.0
  %339 = vmatprep.subr.mxu0 0.0
  %340 = vmatpush1.msra.mxu0 0.0
  %341 = vmatprep.subr.mxu0 0.0
  %342 = vmatpush1.msra.mxu0 0.0
  %343 = vmatprep.subr.mxu0 0.0
  %344 = vmatpush1.msra.mxu0 0.0
  %345 = vmatprep.subr.mxu0 0.0
  %346 = vmatpush1.msra.mxu0 0.0
  %347 = vmatprep.subr.mxu0 0.0
  %348 = vmatpush1.msra.mxu0 0.0
  %349 = vmatprep.subr.mxu0 0.0
  %350 = vmatpush1.msra.mxu0 0.0
  %351 = vmatprep.subr.mxu0 0.0
  %352 = vmatpush1.msra.mxu0 0.0
  %353 = vmatprep.subr.mxu0 0.0
  %354 = vmatpush1.msra.mxu0 0.0
  %355 = vmatprep.subr.mxu0 0.0
  %356 = vmatpush1.msra.mxu0 0.0
  %357 = vmatprep.subr.mxu0 0.0
  %358 = vmatpush1.msra.mxu0 0.0
  %359 = vmatprep.subr.mxu0 0.0
  %360 = vmatpush1.msra.mxu0 %v180
  %361 = vmatprep.subr.mxu0 0.0
  %362 = vmatpush1.msra.mxu0 %v179
  %363 = vmatprep.subr.mxu0 0.0
  %364 = vmatpush1.msra.mxu0 %v178
  %365 = vmatprep.subr.mxu0 0.0
  %366 = vmatpush1.msra.mxu0 %v177
  %367 = vmatprep.subr.mxu0 0.0
  %368 = vmatpush2.msra.mxu0 0.0
  %369 = vmatprep.subr.mxu0 0.0
  %370 = vmatpush2.msra.mxu0 0.0
  %371 = vmatprep.subr.mxu0 0.0
  %372 = vmatpush2.msra.mxu0 0.0
  %373 = vmatprep.subr.mxu0 0.0
  %374 = vmatpush2.msra.mxu0 0.0
  %375 = vmatprep.subr.mxu0 0.0
  %376 = vmatpush2.msra.mxu0 0.0
  %377 = vmatprep.subr.mxu0 0.0
  %378 = vmatpush2.msra.mxu0 0.0
  %379 = vmatprep.subr.mxu0 0.0
  %380 = vmatpush2.msra.mxu0 0.0
  %381 = vmatprep.subr.mxu0 0.0
  %382 = vmatpush2.msra.mxu0 0.0
  %383 = vmatprep.subr.mxu0 0.0
  %384 = vmatpush2.msra.mxu0 0.0
  %385 = vmatprep.subr.mxu0 0.0
  %386 = vmatpush2.msra.mxu0 0.0
  %387 = vmatprep.subr.mxu0 0.0
  %388 = vmatpush2.msra.mxu0 0.0
  %389 = vmatprep.subr.mxu0 0.0
  %390 = vmatpush2.msra.mxu0 0.0
  %391 = vmatprep.subr.mxu0 0.0
  %392 = vmatpush2.msra.mxu0 0.0
  %393 = vmatprep.subr.mxu0 0.0
  %394 = vmatpush2.msra.mxu0 0.0
  %395 = vmatprep.subr.mxu0 0.0
  %396 = vmatpush2.msra.mxu0 0.0
  %397 = vmatprep.subr.mxu0 0.0
  %398 = vmatpush2.msra.mxu0 0.0
  %399 = vmatprep.mubr.f32.mxu0 0.0
  %400 = vmatmul.mubr.f32.gmra.mxu0 %v333
  %v401 = vpop.f32.mrf.mxu0
  %v402 = vadd.f32 0.0, %v401
  %v403 = vpop.f32.mrf.mxu0
  %404 = vdwg.mxu0
  %v405 = vadd.f32 %v149, %v402
  %v406 = vtanh.pop %v405
  %v408 = vsel %vm181, %v406, 0
  %410 = vmatprep.subr.mxu0 0.0
  %411 = vmatpush1.msra.mxu0 0.0
  %412 = vmatprep.subr.mxu0 0.0
  %413 = vmatpush1.msra.mxu0 0.0
  %414 = vmatprep.subr.mxu0 0.0
  %415 = vmatpush1.msra.mxu0 0.0
  %416 = vmatprep.subr.mxu0 0.0
  %417 = vmatpush1.msra.mxu0 0.0
  %418 = vmatprep.subr.mxu0 0.0
  %419 = vmatpush1.msra.mxu0 0.0
  %420 = vmatprep.subr.mxu0 0.0
  %421 = vmatpush1.msra.mxu0 0.0
  %422 = vmatprep.subr.mxu0 0.0
  %423 = vmatpush1.msra.mxu0 0.0
  %424 = vmatprep.subr.mxu0 0.0
  %425 = vmatpush1.msra.mxu0 0.0
  %426 = vmatprep.subr.mxu0 0.0
  %427 = vmatpush1.msra.mxu0 0.0
  %428 = vmatprep.subr.mxu0 0.0
  %429 = vmatpush1.msra.mxu0 0.0
  %430 = vmatprep.subr.mxu0 0.0
  %431 = vmatpush1.msra.mxu0 0.0
  %432 = vmatprep.subr.mxu0 0.0
  %433 = vmatpush1.msra.mxu0 0.0
  %434 = vmatprep.subr.mxu0 0.0
  %435 = vmatpush1.msra.mxu0 %v180
  %436 = vmatprep.subr.mxu0 0.0
  %437 = vmatpush1.msra.mxu0 %v179
  %438 = vmatprep.subr.mxu0 0.0
  %439 = vmatpush1.msra.mxu0 %v178
  %440 = vmatprep.subr.mxu0 0.0
  %441 = vmatpush1.msra.mxu0 %v177
  %442 = vmatprep.subr.mxu0 0.0
  %443 = vmatpush2.msra.mxu0 0.0
  %444 = vmatprep.subr.mxu0 0.0
  %445 = vmatpush2.msra.mxu0 0.0
  %446 = vmatprep.subr.mxu0 0.0
  %447 = vmatpush2.msra.mxu0 0.0
  %448 = vmatprep.subr.mxu0 0.0
  %449 = vmatpush2.msra.mxu0 0.0
  %450 = vmatprep.subr.mxu0 0.0
  %451 = vmatpush2.msra.mxu0 0.0
  %452 = vmatprep.subr.mxu0 0.0
  %453 = vmatpush2.msra.mxu0 0.0
  %454 = vmatprep.subr.mxu0 0.0
  %455 = vmatpush2.msra.mxu0 0.0
  %456 = vmatprep.subr.mxu0 0.0
  %457 = vmatpush2.msra.mxu0 0.0
  %458 = vmatprep.subr.mxu0 0.0
  %459 = vmatpush2.msra.mxu0 0.0
  %460 = vmatprep.subr.mxu0 0.0
  %461 = vmatpush2.msra.mxu0 0.0
  %462 = vmatprep.subr.mxu0 0.0
  %463 = vmatpush2.msra.mxu0 0.0
  %464 = vmatprep.subr.mxu0 0.0
  %465 = vmatpush2.msra.mxu0 0.0
  %466 = vmatprep.subr.mxu0 0.0
  %467 = vmatpush2.msra.mxu0 0.0
  %468 = vmatprep.subr.mxu0 0.0
  %469 = vmatpush2.msra.mxu0 0.0
  %470 = vmatprep.subr.mxu0 0.0
  %471 = vmatpush2.msra.mxu0 0.0
  %472 = vmatprep.subr.mxu0 0.0
  %473 = vmatpush2.msra.mxu0 0.0
  %474 = vmatprep.mubr.f32.mxu0 0.0
  %475 = vmatmul.mubr.f32.gmra.mxu0 %v408
  %v476 = vpop.f32.mrf.mxu0
  %v477 = vadd.f32 0.0, %v476
  %v478 = vpop.f32.mrf.mxu0
  %479 = vdwg.mxu0
  %v480 = vadd.f32 %v154, %v477
  %v481 = vtanh.pop %v480
  %v483 = vsel %vm181, %v481, 0
  %485 = vmatprep.subr.mxu0 0.0
  %486 = vmatpush1.msra.mxu0 0.0
  %487 = vmatprep.subr.mxu0 0.0
  %488 = vmatpush1.msra.mxu0 0.0
  %489 = vmatprep.subr.mxu0 0.0
  %490 = vmatpush1.msra.mxu0 0.0
  %491 = vmatprep.subr.mxu0 0.0
  %492 = vmatpush1.msra.mxu0 0.0
  %493 = vmatprep.subr.mxu0 0.0
  %494 = vmatpush1.msra.mxu0 0.0
  %495 = vmatprep.subr.mxu0 0.0
  %496 = vmatpush1.msra.mxu0 0.0
  %497 = vmatprep.subr.mxu0 0.0
  %498 = vmatpush1.msra.mxu0 0.0
  %499 = vmatprep.subr.mxu0 0.0
  %500 = vmatpush1.msra.mxu0 0.0
  %501 = vmatprep.subr.mxu0 0.0
  %502 = vmatpush1.msra.mxu0 0.0
  %503 = vmatprep.subr.mxu0 0.0
  %504 = vmatpush1.msra.mxu0 0.0
  %505 = vmatprep.subr.mxu0 0.0
  %506 = vmatpush1.msra.mxu0 0.0
  %507 = vmatprep.subr.mxu0 0.0
  %508 = vmatpush1.msra.mxu0 0.0
  %509 = vmatprep.subr.mxu0 0.0
  %510 = vmatpush1.msra.mxu0 %v180
  %511 = vmatprep.subr.mxu0 0.0
  %512 = vmatpush1.msra.mxu0 %v179
  %513 = vmatprep.subr.mxu0 0.0
  %514 = vmatpush1.msra.mxu0 %v178
  %515 = vmatprep.subr.mxu0 0.0
  %516 = vmatpush1.msra.mxu0 %v177
  %517 = vmatprep.subr.mxu0 0.0
  %518 = vmatpush2.msra.mxu0 0.0
  %519 = vmatprep.subr.mxu0 0.0
  %520 = vmatpush2.msra.mxu0 0.0
  %521 = vmatprep.subr.mxu0 0.0
  %522 = vmatpush2.msra.mxu0 0.0
  %523 = vmatprep.subr.mxu0 0.0
  %524 = vmatpush2.msra.mxu0 0.0
  %525 = vmatprep.subr.mxu0 0.0
  %526 = vmatpush2.msra.mxu0 0.0
  %527 = vmatprep.subr.mxu0 0.0
  %528 = vmatpush2.msra.mxu0 0.0
  %529 = vmatprep.subr.mxu0 0.0
  %530 = vmatpush2.msra.mxu0 0.0
  %531 = vmatprep.subr.mxu0 0.0
  %532 = vmatpush2.msra.mxu0 0.0
  %533 = vmatprep.subr.mxu0 0.0
  %534 = vmatpush2.msra.mxu0 0.0
  %535 = vmatprep.subr.mxu0 0.0
  %536 = vmatpush2.msra.mxu0 0.0
  %537 = vmatprep.subr.mxu0 0.0
  %538 = vmatpush2.msra.mxu0 0.0
  %539 = vmatprep.subr.mxu0 0.0
  %540 = vmatpush2.msra.mxu0 0.0
  %541 = vmatprep.subr.mxu0 0.0
  %542 = vmatpush2.msra.mxu0 0.0
  %543 = vmatprep.subr.mxu0 0.0
  %544 = vmatpush2.msra.mxu0 0.0
  %545 = vmatprep.subr.mxu0 0.0
  %546 = vmatpush2.msra.mxu0 0.0
  %547 = vmatprep.subr.mxu0 0.0
  %548 = vmatpush2.msra.mxu0 0.0
  %549 = vmatprep.mubr.f32.mxu0 0.0
  %550 = vmatmul.mubr.f32.gmra.mxu0 %v483
  %v551 = vpop.f32.mrf.mxu0
  %v552 = vadd.f32 0.0, %v551
  %v553 = vpop.f32.mrf.mxu0
  %554 = vdwg.mxu0
  %v555 = vadd.f32 %v159, %v552
  %v556 = vtanh.pop %v555
  %v558 = vsel %vm181, %v556, 0
  %560 = vmatprep.subr.mxu0 0.0
  %561 = vmatpush1.msra.mxu0 0.0
  %562 = vmatprep.subr.mxu0 0.0
  %563 = vmatpush1.msra.mxu0 0.0
  %564 = vmatprep.subr.mxu0 0.0
  %565 = vmatpush1.msra.mxu0 0.0
  %566 = vmatprep.subr.mxu0 0.0
  %567 = vmatpush1.msra.mxu0 0.0
  %568 = vmatprep.subr.mxu0 0.0
  %569 = vmatpush1.msra.mxu0 0.0
  %570 = vmatprep.subr.mxu0 0.0
  %571 = vmatpush1.msra.mxu0 0.0
  %572 = vmatprep.subr.mxu0 0.0
  %573 = vmatpush1.msra.mxu0 0.0
  %574 = vmatprep.subr.mxu0 0.0
  %575 = vmatpush1.msra.mxu0 0.0
  %576 = vmatprep.subr.mxu0 0.0
  %577 = vmatpush1.msra.mxu0 0.0
  %578 = vmatprep.subr.mxu0 0.0
  %579 = vmatpush1.msra.mxu0 0.0
  %580 = vmatprep.subr.mxu0 0.0
  %581 = vmatpush1.msra.mxu0 0.0
  %582 = vmatprep.subr.mxu0 0.0
  %583 = vmatpush1.msra.mxu0 0.0
  %584 = vmatprep.subr.mxu0 0.0
  %585 = vmatpush1.msra.mxu0 %v180
  %586 = vmatprep.subr.mxu0 0.0
  %587 = vmatpush1.msra.mxu0 %v179
  %588 = vmatprep.subr.mxu0 0.0
  %589 = vmatpush1.msra.mxu0 %v178
  %590 = vmatprep.subr.mxu0 0.0
  %591 = vmatpush1.msra.mxu0 %v177
  %592 = vmatprep.subr.mxu0 0.0
  %593 = vmatpush2.msra.mxu0 0.0
  %594 = vmatprep.subr.mxu0 0.0
  %595 = vmatpush2.msra.mxu0 0.0
  %596 = vmatprep.subr.mxu0 0.0
  %597 = vmatpush2.msra.mxu0 0.0
  %598 = vmatprep.subr.mxu0 0.0
  %599 = vmatpush2.msra.mxu0 0.0
  %600 = vmatprep.subr.mxu0 0.0
  %601 = vmatpush2.msra.mxu0 0.0
  %602 = vmatprep.subr.mxu0 0.0
  %603 = vmatpush2.msra.mxu0 0.0
  %604 = vmatprep.subr.mxu0 0.0
  %605 = vmatpush2.msra.mxu0 0.0
  %606 = vmatprep.subr.mxu0 0.0
  %607 = vmatpush2.msra.mxu0 0.0
  %608 = vmatprep.subr.mxu0 0.0
  %609 = vmatpush2.msra.mxu0 0.0
  %610 = vmatprep.subr.mxu0 0.0
  %611 = vmatpush2.msra.mxu0 0.0
  %612 = vmatprep.subr.mxu0 0.0
  %613 = vmatpush2.msra.mxu0 0.0
  %614 = vmatprep.subr.mxu0 0.0
  %615 = vmatpush2.msra.mxu0 0.0
  %616 = vmatprep.subr.mxu0 0.0
  %617 = vmatpush2.msra.mxu0 0.0
  %618 = vmatprep.subr.mxu0 0.0
  %619 = vmatpush2.msra.mxu0 0.0
  %620 = vmatprep.subr.mxu0 0.0
  %621 = vmatpush2.msra.mxu0 0.0
  %622 = vmatprep.subr.mxu0 0.0
  %623 = vmatpush2.msra.mxu0 0.0
  %624 = vmatprep.mubr.f32.mxu0 0.0
  %625 = vmatmul.mubr.f32.gmra.mxu0 %v558
  %v626 = vpop.f32.mrf.mxu0
  %v627 = vadd.f32 0.0, %v626
  %v628 = vpop.f32.mrf.mxu0
  %629 = vdwg.mxu0
  %v630 = vadd.f32 %v164, %v627
  %v631 = vtanh.pop %v630
  %v633 = vsel %vm181, %v631, 0
  %635 = vmatprep.subr.mxu0 0.0
  %636 = vmatpush1.msra.mxu0 0.0
  %637 = vmatprep.subr.mxu0 0.0
  %638 = vmatpush1.msra.mxu0 0.0
  %639 = vmatprep.subr.mxu0 0.0
  %640 = vmatpush1.msra.mxu0 0.0
  %641 = vmatprep.subr.mxu0 0.0
  %642 = vmatpush1.msra.mxu0 0.0
  %643 = vmatprep.subr.mxu0 0.0
  %644 = vmatpush1.msra.mxu0 0.0
  %645 = vmatprep.subr.mxu0 0.0
  %646 = vmatpush1.msra.mxu0 0.0
  %647 = vmatprep.subr.mxu0 0.0
  %648 = vmatpush1.msra.mxu0 0.0
  %649 = vmatprep.subr.mxu0 0.0
  %650 = vmatpush1.msra.mxu0 0.0
  %651 = vmatprep.subr.mxu0 0.0
  %652 = vmatpush1.msra.mxu0 0.0
  %653 = vmatprep.subr.mxu0 0.0
  %654 = vmatpush1.msra.mxu0 0.0
  %655 = vmatprep.subr.mxu0 0.0
  %656 = vmatpush1.msra.mxu0 0.0
  %657 = vmatprep.subr.mxu0 0.0
  %658 = vmatpush1.msra.mxu0 0.0
  %659 = vmatprep.subr.mxu0 0.0
  %660 = vmatpush1.msra.mxu0 %v180
  %661 = vmatprep.subr.mxu0 0.0
  %662 = vmatpush1.msra.mxu0 %v179
  %663 = vmatprep.subr.mxu0 0.0
  %664 = vmatpush1.msra.mxu0 %v178
  %665 = vmatprep.subr.mxu0 0.0
  %666 = vmatpush1.msra.mxu0 %v177
  %667 = vmatprep.subr.mxu0 0.0
  %668 = vmatpush2.msra.mxu0 0.0
  %669 = vmatprep.subr.mxu0 0.0
  %670 = vmatpush2.msra.mxu0 0.0
  %671 = vmatprep.subr.mxu0 0.0
  %672 = vmatpush2.msra.mxu0 0.0
  %673 = vmatprep.subr.mxu0 0.0
  %674 = vmatpush2.msra.mxu0 0.0
  %675 = vmatprep.subr.mxu0 0.0
  %676 = vmatpush2.msra.mxu0 0.0
  %677 = vmatprep.subr.mxu0 0.0
  %678 = vmatpush2.msra.mxu0 0.0
  %679 = vmatprep.subr.mxu0 0.0
  %680 = vmatpush2.msra.mxu0 0.0
  %681 = vmatprep.subr.mxu0 0.0
  %682 = vmatpush2.msra.mxu0 0.0
  %683 = vmatprep.subr.mxu0 0.0
  %684 = vmatpush2.msra.mxu0 0.0
  %685 = vmatprep.subr.mxu0 0.0
  %686 = vmatpush2.msra.mxu0 0.0
  %687 = vmatprep.subr.mxu0 0.0
  %688 = vmatpush2.msra.mxu0 0.0
  %689 = vmatprep.subr.mxu0 0.0
  %690 = vmatpush2.msra.mxu0 0.0
  %691 = vmatprep.subr.mxu0 0.0
  %692 = vmatpush2.msra.mxu0 0.0
  %693 = vmatprep.subr.mxu0 0.0
  %694 = vmatpush2.msra.mxu0 0.0
  %695 = vmatprep.subr.mxu0 0.0
  %696 = vmatpush2.msra.mxu0 0.0
  %697 = vmatprep.subr.mxu0 0.0
  %698 = vmatpush2.msra.mxu0 0.0
  %699 = vmatprep.mubr.f32.mxu0 0.0
  %700 = vmatmul.mubr.f32.gmra.mxu0 %v633
  %v701 = vpop.f32.mrf.mxu0
  %v702 = vadd.f32 0.0, %v701
  %v703 = vpop.f32.mrf.mxu0
  %704 = vdwg.mxu0
  %v705 = vadd.f32 %v169, %v702
  %v706 = vtanh.pop %v705
  %v708 = vsel %vm181, %v706, 0
  %710 = vmatprep.subr.mxu0 0.0
  %711 = vmatpush1.msra.mxu0 0.0
  %712 = vmatprep.subr.mxu0 0.0
  %713 = vmatpush1.msra.mxu0 0.0
  %714 = vmatprep.subr.mxu0 0.0
  %715 = vmatpush1.msra.mxu0 0.0
  %716 = vmatprep.subr.mxu0 0.0
  %717 = vmatpush1.msra.mxu0 0.0
  %718 = vmatprep.subr.mxu0 0.0
  %719 = vmatpush1.msra.mxu0 0.0
  %720 = vmatprep.subr.mxu0 0.0
  %721 = vmatpush1.msra.mxu0 0.0
  %722 = vmatprep.subr.mxu0 0.0
  %723 = vmatpush1.msra.mxu0 0.0
  %724 = vmatprep.subr.mxu0 0.0
  %725 = vmatpush1.msra.mxu0 0.0
  %726 = vmatprep.subr.mxu0 0.0
  %727 = vmatpush1.msra.mxu0 0.0
  %728 = vmatprep.subr.mxu0 0.0
  %729 = vmatpush1.msra.mxu0 0.0
  %730 = vmatprep.subr.mxu0 0.0
  %731 = vmatpush1.msra.mxu0 0.0
  %732 = vmatprep.subr.mxu0 0.0
  %733 = vmatpush1.msra.mxu0 0.0
  %734 = vmatprep.subr.mxu0 0.0
  %735 = vmatpush1.msra.mxu0 %v180
  %736 = vmatprep.subr.mxu0 0.0
  %737 = vmatpush1.msra.mxu0 %v179
  %738 = vmatprep.subr.mxu0 0.0
  %739 = vmatpush1.msra.mxu0 %v178
  %740 = vmatprep.subr.mxu0 0.0
  %741 = vmatpush1.msra.mxu0 %v177
  %742 = vmatprep.subr.mxu0 0.0
  %743 = vmatpush2.msra.mxu0 0.0
  %744 = vmatprep.subr.mxu0 0.0
  %745 = vmatpush2.msra.mxu0 0.0
  %746 = vmatprep.subr.mxu0 0.0
  %747 = vmatpush2.msra.mxu0 0.0
  %748 = vmatprep.subr.mxu0 0.0
  %749 = vmatpush2.msra.mxu0 0.0
  %750 = vmatprep.subr.mxu0 0.0
  %751 = vmatpush2.msra.mxu0 0.0
  %752 = vmatprep.subr.mxu0 0.0
  %753 = vmatpush2.msra.mxu0 0.0
  %754 = vmatprep.subr.mxu0 0.0
  %755 = vmatpush2.msra.mxu0 0.0
  %756 = vmatprep.subr.mxu0 0.0
  %757 = vmatpush2.msra.mxu0 0.0
  %758 = vmatprep.subr.mxu0 0.0
  %759 = vmatpush2.msra.mxu0 0.0
  %760 = vmatprep.subr.mxu0 0.0
  %761 = vmatpush2.msra.mxu0 0.0
  %762 = vmatprep.subr.mxu0 0.0
  %763 = vmatpush2.msra.mxu0 0.0
  %764 = vmatprep.subr.mxu0 0.0
  %765 = vmatpush2.msra.mxu0 0.0
  %766 = vmatprep.subr.mxu0 0.0
  %767 = vmatpush2.msra.mxu0 0.0
  %768 = vmatprep.subr.mxu0 0.0
  %769 = vmatpush2.msra.mxu0 0.0
  %770 = vmatprep.subr.mxu0 0.0
  %771 = vmatpush2.msra.mxu0 0.0
  %772 = vmatprep.subr.mxu0 0.0
  %773 = vmatpush2.msra.mxu0 0.0
  %774 = vmatprep.mubr.f32.mxu0 0.0
  %775 = vmatmul.mubr.f32.gmra.mxu0 %v708
  %v776 = vpop.f32.mrf.mxu0
  %v777 = vadd.f32 0.0, %v776
  %v778 = vpop.f32.mrf.mxu0
  %779 = vdwg.mxu0
  %v780 = vadd.f32 %v174, %v777
  %v781 = vtanh.pop %v780
  %v782 = vld [vmem:[%s6] sm:$0x1]
  %v784 = vlaneseq
  %v785 = vshrl.u32 %v784, 7
  %v786 = vsub.s32 0, %v785
  %v787 = vrot.slane %v782, %v786
  %v789 = vmul.f32 %v781, %v787
  %v790 = vsel %vm181, %v789, 0.0
  %791 = vadd.xlane.f32.xlu0 %v790
  %v792 = vpop.xlane.xlu0 %791
  %v793 = vld [vmem:[%s2] sm:$0xff]
  %v794 = vmul.f32 %v792, %v793
  %vm795 = vcmask 130048
  %v796 = vsel %vm795, %v794, 0.0
  %v797 = vrot.slane %v796, 4
  %v798 = vadd.f32 %v796, %v797
  %v799 = vrot.slane %v798, 2
  %v800 = vadd.f32 %v798, %v799
  %v801 = vrot.slane %v800, 1
  %v802 = vadd.f32 %v800, %v801
  %v804 = vsel %vm47, %v29, 0
  %806 = vmatprep.subr.mxu0 0.0
  %807 = vmatpush1.msra.mxu0 0.0
  %808 = vmatprep.subr.mxu0 0.0
  %809 = vmatpush1.msra.mxu0 0.0
  %810 = vmatprep.subr.mxu0 0.0
  %811 = vmatpush1.msra.mxu0 0.0
  %812 = vmatprep.subr.mxu0 0.0
  %813 = vmatpush1.msra.mxu0 0.0
  %814 = vmatprep.subr.mxu0 0.0
  %815 = vmatpush1.msra.mxu0 0.0
  %816 = vmatprep.subr.mxu0 0.0
  %817 = vmatpush1.msra.mxu0 0.0
  %818 = vmatprep.subr.mxu0 0.0
  %819 = vmatpush1.msra.mxu0 0.0
  %820 = vmatprep.subr.mxu0 0.0
  %821 = vmatpush1.msra.mxu0 0.0
  %822 = vmatprep.subr.mxu0 0.0
  %823 = vmatpush1.msra.mxu0 0.0
  %824 = vmatprep.subr.mxu0 0.0
  %825 = vmatpush1.msra.mxu0 0.0
  %826 = vmatprep.subr.mxu0 0.0
  %827 = vmatpush1.msra.mxu0 0.0
  %828 = vmatprep.subr.mxu0 0.0
  %829 = vmatpush1.msra.mxu0 0.0
  %830 = vmatprep.subr.mxu0 0.0
  %831 = vmatpush1.msra.mxu0 0.0
  %832 = vmatprep.subr.mxu0 0.0
  %833 = vmatpush1.msra.mxu0 0.0
  %834 = vmatprep.subr.mxu0 0.0
  %835 = vmatpush1.msra.mxu0 0.0
  %836 = vmatprep.subr.mxu0 0.0
  %837 = vmatpush1.msra.mxu0 %v30
  %838 = vmatprep.subr.mxu0 0.0
  %839 = vmatpush2.msra.mxu0 0.0
  %840 = vmatprep.subr.mxu0 0.0
  %841 = vmatpush2.msra.mxu0 0.0
  %842 = vmatprep.subr.mxu0 0.0
  %843 = vmatpush2.msra.mxu0 0.0
  %844 = vmatprep.subr.mxu0 0.0
  %845 = vmatpush2.msra.mxu0 0.0
  %846 = vmatprep.subr.mxu0 0.0
  %847 = vmatpush2.msra.mxu0 0.0
  %848 = vmatprep.subr.mxu0 0.0
  %849 = vmatpush2.msra.mxu0 0.0
  %850 = vmatprep.subr.mxu0 0.0
  %851 = vmatpush2.msra.mxu0 0.0
  %852 = vmatprep.subr.mxu0 0.0
  %853 = vmatpush2.msra.mxu0 0.0
  %854 = vmatprep.subr.mxu0 0.0
  %855 = vmatpush2.msra.mxu0 0.0
  %856 = vmatprep.subr.mxu0 0.0
  %857 = vmatpush2.msra.mxu0 0.0
  %858 = vmatprep.subr.mxu0 0.0
  %859 = vmatpush2.msra.mxu0 0.0
  %860 = vmatprep.subr.mxu0 0.0
  %861 = vmatpush2.msra.mxu0 0.0
  %862 = vmatprep.subr.mxu0 0.0
  %863 = vmatpush2.msra.mxu0 0.0
  %864 = vmatprep.subr.mxu0 0.0
  %865 = vmatpush2.msra.mxu0 0.0
  %866 = vmatprep.subr.mxu0 0.0
  %867 = vmatpush2.msra.mxu0 0.0
  %868 = vmatprep.subr.mxu0 0.0
  %869 = vmatpush2.msra.mxu0 0.0
  %870 = vmatprep.mubr.f32.mxu0 0.0
  %871 = vmatmul.mubr.f32.gmra.mxu0 %v804
  %v872 = vpop.f32.mrf.mxu0
  %v873 = vadd.f32 %v802, %v872
  %v874 = vpop.f32.mrf.mxu0
  %875 = vdwg.mxu0
  %vm876 = vcmask 122880
  %877 = vst.msk [vmem:[%s8] sm:$0x1] %vm876, %v873
  // Predicated region
  $region34: #{_lambda_.1} parent=0 // pred_check
    _
  $region35: #{_lambda_.1} parent=0 // pred_check_branch
    %879 = sbr.rel (0) target = $region37
  $region36: #{_lambda_.1} parent=0 // pred_region
    _
  $region37: #{_lambda_.1} parent=0 // pred_fallthru
    _
  // Predicated region
  $region38: #{_lambda_.1} parent=0 // pred_check
    _
  $region39: #{_lambda_.1} parent=0 // pred_check_branch
    %881 = sbr.rel (0) target = $region41
  $region40: #{_lambda_.1} parent=0 // pred_region
    _
  $region41: #{_lambda_.1} parent=0 // pred_fallthru
    _

</llo_original>
